<compile_context>
chip_gen: v5e
topology: v5e:2x2
jax: 0.10.0
libtpu: 0.0.40
codegen_flags: <defaults>
</compile_context>

<pallas_src>
import functools

import jax
import jax.numpy as jnp
from jax import lax
from jax.experimental import pallas as pl
from jax.experimental.pallas import tpu as pltpu


def _attention_kernel(x_ref, wqkv_ref, wo_ref, bout_ref, out_ref, attn_ref,
                      *, heads, dim_head):
    # x_ref:    (1, N, D)            current batch element
    # wqkv_ref: (D, 3*H*dh)          fused QKV weights (q cols pre-scaled), resident
    # wo_ref:   (H*dh, D)            output projection weights, resident
    # bout_ref: (1, D)               output projection bias, resident
    # out_ref:  (1, N, D)            projected output
    # attn_ref: (1, H, N, N)         per-head attention maps (pre-dropout)
    inner = heads * dim_head
    x = x_ref[0]                                                    # (N, D)

    # Fused, lane-dense QKV projection (scale already folded into q columns).
    qkv = jnp.dot(x, wqkv_ref[...],
                  preferred_element_type=jnp.float32)               # (N, 3*inner)
    q_all = qkv[:, :inner]
    k_all = qkv[:, inner:2 * inner]
    v_all = qkv[:, 2 * inner:]

    o_heads = []
    for h in range(heads):                                          # static unroll
        lo, hi = h * dim_head, (h + 1) * dim_head
        qh = q_all[:, lo:hi]                                        # (N, dh)
        kh = k_all[:, lo:hi]
        vh = v_all[:, lo:hi]

        # q @ k^T without materializing a transpose.
        dots = lax.dot_general(qh, kh, (((1,), (1,)), ((), ())),
                               preferred_element_type=jnp.float32)  # (N, N)

        # Numerically stable softmax; divide on the EUP (exact reciprocal —
        # attn is a module output compared at 1e-4).
        m = jnp.max(dots, axis=-1, keepdims=True)
        e = jnp.exp(dots - m)
        denom = jnp.sum(e, axis=-1, keepdims=True)
        attn = e * pl.reciprocal(denom, approx=False)
        attn_ref[0, h] = attn

        o_heads.append(jnp.dot(attn, vh,
                               preferred_element_type=jnp.float32))  # (N, dh)

    # Fused output projection: (N, H*dh) @ (H*dh, D) + bias.
    o = jnp.concatenate(o_heads, axis=-1)                           # (N, inner)
    out_ref[0] = jnp.dot(o, wo_ref[...],
                         preferred_element_type=jnp.float32) + bout_ref[...]


def attention_forward(x, w_qkv, w_out, b_out, *, heads, dim_head):
    """x: (B, N, D) float32. Returns (out (B,N,D), attn (B,H,N,N))."""
    B, N, D = x.shape
    inner = heads * dim_head
    scale = dim_head ** (-0.5)

    # Host-side prep (cheap; cache this for repeated forward calls with static
    # weights): fold the softmax scale into the q columns of the fused QKV
    # weight so the kernel does no in-kernel scaling.
    w_qkv_fused = jnp.concatenate([w_qkv[:, :inner] * scale, w_qkv[:, inner:]],
                                  axis=1)                           # (D, 3*inner)

    kernel = functools.partial(_attention_kernel, heads=heads, dim_head=dim_head)

    out_shapes = (
        jax.ShapeDtypeStruct((B, N, D), jnp.float32),
        jax.ShapeDtypeStruct((B, heads, N, N), jnp.float32),
    )

    grid_spec = pltpu.PrefetchScalarGridSpec(
        num_scalar_prefetch=0,
        grid=(B,),
        in_specs=[
            pl.BlockSpec((1, N, D), lambda b: (b, 0, 0)),           # x
            pl.BlockSpec((D, 3 * inner), lambda b: (0, 0)),         # W_qkv (resident)
            pl.BlockSpec((inner, D), lambda b: (0, 0)),             # W_out (resident)
            pl.BlockSpec((1, D), lambda b: (0, 0)),                 # bias  (resident)
        ],
        out_specs=[
            pl.BlockSpec((1, N, D), lambda b: (b, 0, 0)),           # out
            pl.BlockSpec((1, heads, N, N), lambda b: (b, 0, 0, 0)), # attn maps
        ],
    )

    return pl.pallas_call(
        kernel,
        out_shape=out_shapes,
        grid_spec=grid_spec,
        compiler_params=pltpu.CompilerParams(
            dimension_semantics=("parallel",),
            vmem_limit_bytes=32 * 1024 * 1024,
        ),
    )(x, w_qkv_fused, w_out, b_out)


def attention_reference(x, w_qkv, w_out, b_out, *, heads, dim_head):
    """Plain-JAX reference mirroring the PyTorch forward (dropout=0)."""
    B, N, D = x.shape
    inner = heads * dim_head
    scale = dim_head ** (-0.5)
    qkv = x @ w_qkv                                       # (B, N, 3*inner)
    q, k, v = jnp.split(qkv, 3, axis=-1)

    def to_heads(t):                                      # b n (h d) -> b h n d
        return t.reshape(B, N, heads, dim_head).transpose(0, 2, 1, 3)

    q, k, v = map(to_heads, (q, k, v))
    dots = jnp.einsum("bhnd,bhmd->bhnm", q, k) * scale
    attn = jax.nn.softmax(dots, axis=-1)
    out = jnp.einsum("bhnm,bhmd->bhnd", attn, v)
    out = out.transpose(0, 2, 1, 3).reshape(B, N, inner)  # b h n d -> b n (h d)
    out = out @ w_out + b_out[0]
    return out, attn


if __name__ == "__main__":
    # Small deterministic configuration consistent with the module:
    #   dim=32, heads=4, dim_head=16 -> inner_dim=64, project_out=True
    B, N, dim = 2, 8, 32
    heads, dim_head = 4, 16
    inner = heads * dim_head

    key = jax.random.PRNGKey(0)
    kx, kqkv, kw, kb = jax.random.split(key, 4)

    x = jax.random.normal(kx, (B, N, dim), dtype=jnp.float32)
    # to_qkv: Linear(dim, inner*3, bias=False); stored as (dim, 3*inner) so y = x @ W
    w_qkv = jax.random.normal(kqkv, (dim, 3 * inner), dtype=jnp.float32) * 0.05
    # to_out: Linear(inner, dim) with bias; stored as (inner, dim)
    w_out = jax.random.normal(kw, (inner, dim), dtype=jnp.float32) * 0.05
    b_out = jax.random.normal(kb, (1, dim), dtype=jnp.float32) * 0.05

    out, attn = attention_forward(x, w_qkv, w_out, b_out,
                                  heads=heads, dim_head=dim_head)
    out = jax.block_until_ready(out)
    attn = jax.block_until_ready(attn)

    out_ref, attn_ref = attention_reference(x, w_qkv, w_out, b_out,
                                            heads=heads, dim_head=dim_head)
    assert out.shape == (B, N, dim) and attn.shape == (B, heads, N, N)
    assert jnp.allclose(out, out_ref, atol=1e-4, rtol=1e-4)
    assert jnp.allclose(attn, attn_ref, atol=1e-4, rtol=1e-4)

    print("KERNEL_OK")
</pallas_src>

<mosaic_0001>
module attributes {stable_mosaic.version = 11 : i64} {
  func.func @_attention_kernel(%arg0: i32, %arg1: memref<1x8x32xf32, #tpu.memory_space<vmem>>, %arg2: memref<32x192xf32, #tpu.memory_space<vmem>>, %arg3: memref<64x32xf32, #tpu.memory_space<vmem>>, %arg4: memref<1x32xf32, #tpu.memory_space<vmem>>, %arg5: memref<1x8x32xf32, #tpu.memory_space<vmem>>, %arg6: memref<1x4x8x8xf32, #tpu.memory_space<vmem>>) attributes {dimension_semantics = [#tpu.dimension_semantics<parallel>], iteration_bounds = array<i64: 2>, scalar_prefetch = 0 : i64, scratch_operands = 0 : i64, tpu.core_type = #tpu.core_type<tc>, window_params = [{transform_indices = @transform_0, window_bounds = array<i64: 1, 8, 32>}, {pipeline_mode = #tpu.pipeline_mode<synchronous>, transform_indices = @transform_1, window_bounds = array<i64: 32, 192>}, {pipeline_mode = #tpu.pipeline_mode<synchronous>, transform_indices = @transform_2, window_bounds = array<i64: 64, 32>}, {pipeline_mode = #tpu.pipeline_mode<synchronous>, transform_indices = @transform_3, window_bounds = array<i64: 1, 32>}, {transform_indices = @transform_4, window_bounds = array<i64: 1, 8, 32>}, {transform_indices = @transform_5, window_bounds = array<i64: 1, 4, 8, 8>}]} {
    %c0 = arith.constant 0 : index
    %c0_0 = arith.constant 0 : index
    %c0_1 = arith.constant 0 : index
    %0 = vector.load %arg1[%c0, %c0_0, %c0_1] : memref<1x8x32xf32, #tpu.memory_space<vmem>>, vector<1x8x32xf32>
    %1 = vector.shape_cast %0 : vector<1x8x32xf32> to vector<8x32xf32>
    %c0_2 = arith.constant 0 : index
    %c0_3 = arith.constant 0 : index
    %2 = vector.load %arg2[%c0_2, %c0_3] : memref<32x192xf32, #tpu.memory_space<vmem>>, vector<32x192xf32>
    %cst = arith.constant dense<0.000000e+00> : vector<8x192xf32>
    %3 = tpu.matmul %1, %2, %cst {dimension_numbers = #tpu.dot_dimension_numbers<[1], [0], [0], [1], [0, 0, 1, 1], [], []>} : vector<8x32xf32>, vector<32x192xf32>, vector<8x192xf32> -> vector<8x192xf32>
    %4 = vector.extract_strided_slice %3 {offsets = [0, 0], sizes = [8, 64], strides = [1, 1]} : vector<8x192xf32> to vector<8x64xf32>
    %5 = vector.extract_strided_slice %3 {offsets = [0, 64], sizes = [8, 64], strides = [1, 1]} : vector<8x192xf32> to vector<8x64xf32>
    %6 = vector.extract_strided_slice %3 {offsets = [0, 128], sizes = [8, 64], strides = [1, 1]} : vector<8x192xf32> to vector<8x64xf32>
    %7 = vector.extract_strided_slice %4 {offsets = [0, 0], sizes = [8, 16], strides = [1, 1]} : vector<8x64xf32> to vector<8x16xf32>
    %8 = vector.extract_strided_slice %5 {offsets = [0, 0], sizes = [8, 16], strides = [1, 1]} : vector<8x64xf32> to vector<8x16xf32>
    %9 = vector.extract_strided_slice %6 {offsets = [0, 0], sizes = [8, 16], strides = [1, 1]} : vector<8x64xf32> to vector<8x16xf32>
    %cst_4 = arith.constant dense<0.000000e+00> : vector<8x8xf32>
    %10 = tpu.matmul %7, %8, %cst_4 {dimension_numbers = #tpu.dot_dimension_numbers<[1], [1], [0], [0], [0, 0, 1, 0], [], []>} : vector<8x16xf32>, vector<8x16xf32>, vector<8x8xf32> -> vector<8x8xf32>
    %cst_5 = arith.constant dense<0xFF800000> : vector<8xf32>
    %11 = vector.multi_reduction <maximumf>, %10, %cst_5 [1] : vector<8x8xf32> to vector<8xf32>
    %12 = vector.shape_cast %11 : vector<8xf32> to vector<8x1xf32>
    %13 = vector.broadcast %12 : vector<8x1xf32> to vector<8x8xf32>
    %14 = arith.subf %10, %13 : vector<8x8xf32>
    %15 = math.exp %14 : vector<8x8xf32>
    %cst_6 = arith.constant dense<0.000000e+00> : vector<8xf32>
    %16 = vector.multi_reduction <add>, %15, %cst_6 [1] : vector<8x8xf32> to vector<8xf32>
    %17 = vector.shape_cast %16 : vector<8xf32> to vector<8x1xf32>
    %18 = tpu.reciprocal %17 : vector<8x1xf32> -> vector<8x1xf32>
    %19 = vector.broadcast %18 : vector<8x1xf32> to vector<8x8xf32>
    %20 = arith.mulf %15, %19 : vector<8x8xf32>
    %c0_7 = arith.constant 0 : index
    %c0_8 = arith.constant 0 : index
    %c0_9 = arith.constant 0 : index
    %c0_10 = arith.constant 0 : index
    %21 = vector.load %arg6[%c0_7, %c0_8, %c0_9, %c0_10] : memref<1x4x8x8xf32, #tpu.memory_space<vmem>>, vector<1x1x8x8xf32>
    %22 = vector.shape_cast %21 : vector<1x1x8x8xf32> to vector<8x8xf32>
    %23 = vector.shape_cast %20 : vector<8x8xf32> to vector<1x1x8x8xf32>
    tpu.vector_store %arg6[%c0_7, %c0_8, %c0_9, %c0_10], %23 {strides = array<i32>} : memref<1x4x8x8xf32, #tpu.memory_space<vmem>>, vector<1x1x8x8xf32>,
    %cst_11 = arith.constant dense<0.000000e+00> : vector<8x16xf32>
    %24 = tpu.matmul %20, %9, %cst_11 {dimension_numbers = #tpu.dot_dimension_numbers<[1], [0], [0], [1], [0, 0, 1, 1], [], []>} : vector<8x8xf32>, vector<8x16xf32>, vector<8x16xf32> -> vector<8x16xf32>
    %25 = vector.extract_strided_slice %4 {offsets = [0, 16], sizes = [8, 16], strides = [1, 1]} : vector<8x64xf32> to vector<8x16xf32>
    %26 = vector.extract_strided_slice %5 {offsets = [0, 16], sizes = [8, 16], strides = [1, 1]} : vector<8x64xf32> to vector<8x16xf32>
    %27 = vector.extract_strided_slice %6 {offsets = [0, 16], sizes = [8, 16], strides = [1, 1]} : vector<8x64xf32> to vector<8x16xf32>
    %cst_12 = arith.constant dense<0.000000e+00> : vector<8x8xf32>
    %28 = tpu.matmul %25, %26, %cst_12 {dimension_numbers = #tpu.dot_dimension_numbers<[1], [1], [0], [0], [0, 0, 1, 0], [], []>} : vector<8x16xf32>, vector<8x16xf32>, vector<8x8xf32> -> vector<8x8xf32>
    %cst_13 = arith.constant dense<0xFF800000> : vector<8xf32>
    %29 = vector.multi_reduction <maximumf>, %28, %cst_13 [1] : vector<8x8xf32> to vector<8xf32>
    %30 = vector.shape_cast %29 : vector<8xf32> to vector<8x1xf32>
    %31 = vector.broadcast %30 : vector<8x1xf32> to vector<8x8xf32>
    %32 = arith.subf %28, %31 : vector<8x8xf32>
    %33 = math.exp %32 : vector<8x8xf32>
    %cst_14 = arith.constant dense<0.000000e+00> : vector<8xf32>
    %34 = vector.multi_reduction <add>, %33, %cst_14 [1] : vector<8x8xf32> to vector<8xf32>
    %35 = vector.shape_cast %34 : vector<8xf32> to vector<8x1xf32>
    %36 = tpu.reciprocal %35 : vector<8x1xf32> -> vector<8x1xf32>
    %37 = vector.broadcast %36 : vector<8x1xf32> to vector<8x8xf32>
    %38 = arith.mulf %33, %37 : vector<8x8xf32>
    %c0_15 = arith.constant 0 : index
    %c1 = arith.constant 1 : index
    %c0_16 = arith.constant 0 : index
    %c0_17 = arith.constant 0 : index
    %39 = vector.load %arg6[%c0_15, %c1, %c0_16, %c0_17] : memref<1x4x8x8xf32, #tpu.memory_space<vmem>>, vector<1x1x8x8xf32>
    %40 = vector.shape_cast %39 : vector<1x1x8x8xf32> to vector<8x8xf32>
    %41 = vector.shape_cast %38 : vector<8x8xf32> to vector<1x1x8x8xf32>
    tpu.vector_store %arg6[%c0_15, %c1, %c0_16, %c0_17], %41 {strides = array<i32>} : memref<1x4x8x8xf32, #tpu.memory_space<vmem>>, vector<1x1x8x8xf32>,
    %cst_18 = arith.constant dense<0.000000e+00> : vector<8x16xf32>
    %42 = tpu.matmul %38, %27, %cst_18 {dimension_numbers = #tpu.dot_dimension_numbers<[1], [0], [0], [1], [0, 0, 1, 1], [], []>} : vector<8x8xf32>, vector<8x16xf32>, vector<8x16xf32> -> vector<8x16xf32>
    %43 = vector.extract_strided_slice %4 {offsets = [0, 32], sizes = [8, 16], strides = [1, 1]} : vector<8x64xf32> to vector<8x16xf32>
    %44 = vector.extract_strided_slice %5 {offsets = [0, 32], sizes = [8, 16], strides = [1, 1]} : vector<8x64xf32> to vector<8x16xf32>
    %45 = vector.extract_strided_slice %6 {offsets = [0, 32], sizes = [8, 16], strides = [1, 1]} : vector<8x64xf32> to vector<8x16xf32>
    %cst_19 = arith.constant dense<0.000000e+00> : vector<8x8xf32>
    %46 = tpu.matmul %43, %44, %cst_19 {dimension_numbers = #tpu.dot_dimension_numbers<[1], [1], [0], [0], [0, 0, 1, 0], [], []>} : vector<8x16xf32>, vector<8x16xf32>, vector<8x8xf32> -> vector<8x8xf32>
    %cst_20 = arith.constant dense<0xFF800000> : vector<8xf32>
    %47 = vector.multi_reduction <maximumf>, %46, %cst_20 [1] : vector<8x8xf32> to vector<8xf32>
    %48 = vector.shape_cast %47 : vector<8xf32> to vector<8x1xf32>
    %49 = vector.broadcast %48 : vector<8x1xf32> to vector<8x8xf32>
    %50 = arith.subf %46, %49 : vector<8x8xf32>
    %51 = math.exp %50 : vector<8x8xf32>
    %cst_21 = arith.constant dense<0.000000e+00> : vector<8xf32>
    %52 = vector.multi_reduction <add>, %51, %cst_21 [1] : vector<8x8xf32> to vector<8xf32>
    %53 = vector.shape_cast %52 : vector<8xf32> to vector<8x1xf32>
    %54 = tpu.reciprocal %53 : vector<8x1xf32> -> vector<8x1xf32>
    %55 = vector.broadcast %54 : vector<8x1xf32> to vector<8x8xf32>
    %56 = arith.mulf %51, %55 : vector<8x8xf32>
    %c0_22 = arith.constant 0 : index
    %c2 = arith.constant 2 : index
    %c0_23 = arith.constant 0 : index
    %c0_24 = arith.constant 0 : index
    %57 = vector.load %arg6[%c0_22, %c2, %c0_23, %c0_24] : memref<1x4x8x8xf32, #tpu.memory_space<vmem>>, vector<1x1x8x8xf32>
    %58 = vector.shape_cast %57 : vector<1x1x8x8xf32> to vector<8x8xf32>
    %59 = vector.shape_cast %56 : vector<8x8xf32> to vector<1x1x8x8xf32>
    tpu.vector_store %arg6[%c0_22, %c2, %c0_23, %c0_24], %59 {strides = array<i32>} : memref<1x4x8x8xf32, #tpu.memory_space<vmem>>, vector<1x1x8x8xf32>,
    %cst_25 = arith.constant dense<0.000000e+00> : vector<8x16xf32>
    %60 = tpu.matmul %56, %45, %cst_25 {dimension_numbers = #tpu.dot_dimension_numbers<[1], [0], [0], [1], [0, 0, 1, 1], [], []>} : vector<8x8xf32>, vector<8x16xf32>, vector<8x16xf32> -> vector<8x16xf32>
    %61 = vector.extract_strided_slice %4 {offsets = [0, 48], sizes = [8, 16], strides = [1, 1]} : vector<8x64xf32> to vector<8x16xf32>
    %62 = vector.extract_strided_slice %5 {offsets = [0, 48], sizes = [8, 16], strides = [1, 1]} : vector<8x64xf32> to vector<8x16xf32>
    %63 = vector.extract_strided_slice %6 {offsets = [0, 48], sizes = [8, 16], strides = [1, 1]} : vector<8x64xf32> to vector<8x16xf32>
    %cst_26 = arith.constant dense<0.000000e+00> : vector<8x8xf32>
    %64 = tpu.matmul %61, %62, %cst_26 {dimension_numbers = #tpu.dot_dimension_numbers<[1], [1], [0], [0], [0, 0, 1, 0], [], []>} : vector<8x16xf32>, vector<8x16xf32>, vector<8x8xf32> -> vector<8x8xf32>
    %cst_27 = arith.constant dense<0xFF800000> : vector<8xf32>
    %65 = vector.multi_reduction <maximumf>, %64, %cst_27 [1] : vector<8x8xf32> to vector<8xf32>
    %66 = vector.shape_cast %65 : vector<8xf32> to vector<8x1xf32>
    %67 = vector.broadcast %66 : vector<8x1xf32> to vector<8x8xf32>
    %68 = arith.subf %64, %67 : vector<8x8xf32>
    %69 = math.exp %68 : vector<8x8xf32>
    %cst_28 = arith.constant dense<0.000000e+00> : vector<8xf32>
    %70 = vector.multi_reduction <add>, %69, %cst_28 [1] : vector<8x8xf32> to vector<8xf32>
    %71 = vector.shape_cast %70 : vector<8xf32> to vector<8x1xf32>
    %72 = tpu.reciprocal %71 : vector<8x1xf32> -> vector<8x1xf32>
    %73 = vector.broadcast %72 : vector<8x1xf32> to vector<8x8xf32>
    %74 = arith.mulf %69, %73 : vector<8x8xf32>
    %c0_29 = arith.constant 0 : index
    %c3 = arith.constant 3 : index
    %c0_30 = arith.constant 0 : index
    %c0_31 = arith.constant 0 : index
    %75 = vector.load %arg6[%c0_29, %c3, %c0_30, %c0_31] : memref<1x4x8x8xf32, #tpu.memory_space<vmem>>, vector<1x1x8x8xf32>
    %76 = vector.shape_cast %75 : vector<1x1x8x8xf32> to vector<8x8xf32>
    %77 = vector.shape_cast %74 : vector<8x8xf32> to vector<1x1x8x8xf32>
    tpu.vector_store %arg6[%c0_29, %c3, %c0_30, %c0_31], %77 {strides = array<i32>} : memref<1x4x8x8xf32, #tpu.memory_space<vmem>>, vector<1x1x8x8xf32>,
    %cst_32 = arith.constant dense<0.000000e+00> : vector<8x16xf32>
    %78 = tpu.matmul %74, %63, %cst_32 {dimension_numbers = #tpu.dot_dimension_numbers<[1], [0], [0], [1], [0, 0, 1, 1], [], []>} : vector<8x8xf32>, vector<8x16xf32>, vector<8x16xf32> -> vector<8x16xf32>
    %79 = tpu.concatenate %24, %42, %60, %78 in 1 : vector<8x16xf32>, vector<8x16xf32>, vector<8x16xf32>, vector<8x16xf32> -> vector<8x64xf32>
    %c0_33 = arith.constant 0 : index
    %c0_34 = arith.constant 0 : index
    %80 = vector.load %arg3[%c0_33, %c0_34] : memref<64x32xf32, #tpu.memory_space<vmem>>, vector<64x32xf32>
    %cst_35 = arith.constant dense<0.000000e+00> : vector<8x32xf32>
    %81 = tpu.matmul %79, %80, %cst_35 {dimension_numbers = #tpu.dot_dimension_numbers<[1], [0], [0], [1], [0, 0, 1, 1], [], []>} : vector<8x64xf32>, vector<64x32xf32>, vector<8x32xf32> -> vector<8x32xf32>
    %c0_36 = arith.constant 0 : index
    %c0_37 = arith.constant 0 : index
    %82 = vector.load %arg4[%c0_36, %c0_37] : memref<1x32xf32, #tpu.memory_space<vmem>>, vector<1x32xf32>
    %83 = vector.broadcast %82 : vector<1x32xf32> to vector<8x32xf32>
    %84 = arith.addf %81, %83 : vector<8x32xf32>
    %c0_38 = arith.constant 0 : index
    %c0_39 = arith.constant 0 : index
    %c0_40 = arith.constant 0 : index
    %85 = vector.load %arg5[%c0_38, %c0_39, %c0_40] : memref<1x8x32xf32, #tpu.memory_space<vmem>>, vector<1x8x32xf32>
    %86 = vector.shape_cast %85 : vector<1x8x32xf32> to vector<8x32xf32>
    %87 = vector.shape_cast %84 : vector<8x32xf32> to vector<1x8x32xf32>
    tpu.vector_store %arg5[%c0_38, %c0_39, %c0_40], %87 {strides = array<i32>} : memref<1x8x32xf32, #tpu.memory_space<vmem>>, vector<1x8x32xf32>,
    return
  }
  func.func @transform_0(%arg0: i32) -> (i32, i32, i32) {
    %c0_i32 = arith.constant 0 : i32
    %c0_i32_0 = arith.constant 0 : i32
    %c0_i32_1 = arith.constant 0 : i32
    return %arg0, %c0_i32, %c0_i32_0 : i32, i32, i32
  }
  func.func @transform_1(%arg0: i32) -> (i32, i32) {
    %c0_i32 = arith.constant 0 : i32
    %c0_i32_0 = arith.constant 0 : i32
    %c0_i32_1 = arith.constant 0 : i32
    return %c0_i32, %c0_i32_0 : i32, i32
  }
  func.func @transform_2(%arg0: i32) -> (i32, i32) {
    %c0_i32 = arith.constant 0 : i32
    %c0_i32_0 = arith.constant 0 : i32
    %c0_i32_1 = arith.constant 0 : i32
    return %c0_i32, %c0_i32_0 : i32, i32
  }
  func.func @transform_3(%arg0: i32) -> (i32, i32) {
    %c0_i32 = arith.constant 0 : i32
    %c0_i32_0 = arith.constant 0 : i32
    %c0_i32_1 = arith.constant 0 : i32
    return %c0_i32, %c0_i32_0 : i32, i32
  }
  func.func @transform_4(%arg0: i32) -> (i32, i32, i32) {
    %c0_i32 = arith.constant 0 : i32
    %c0_i32_0 = arith.constant 0 : i32
    %c0_i32_1 = arith.constant 0 : i32
    return %arg0, %c0_i32, %c0_i32_0 : i32, i32, i32
  }
  func.func @transform_5(%arg0: i32) -> (i32, i32, i32, i32) {
    %c0_i32 = arith.constant 0 : i32
    %c0_i32_0 = arith.constant 0 : i32
    %c0_i32_1 = arith.constant 0 : i32
    %c0_i32_2 = arith.constant 0 : i32
    return %arg0, %c0_i32, %c0_i32_0, %c0_i32_1 : i32, i32, i32, i32
  }
}

</mosaic_0001>

<llo_original>
// kernel: tpu_custom_call.1
$region0: #{tpu_custom_call.1}
  #allocation0 [shape = 'u32[]', space=smem, size = 0x4, offset = 0x4, fixed_abs, tag = 'smem constant byte address 0x4 - core index']
  #allocation1 [shape = 'u32[72,128]{1,0:T(1,128)}', space=vmem, size = 0x9000, scoped, tag = 'internal scratch']
  %s0 = inlined_call_operand.vmem [shape: f32[2,8,32], index: 0, kind: input, shape index: {}]
  %s1 = inlined_call_operand.vmem [shape: f32[32,192], index: 1, kind: input, shape index: {}]
  %s2 = inlined_call_operand.vmem [shape: f32[64,32], index: 2, kind: input, shape index: {}]
  %s3 = inlined_call_operand.vmem [shape: f32[1,32], index: 3, kind: input, shape index: {}]
  %s4 = inlined_call_operand.hbm [shape: f32[2,8,32], index: 4, kind: output, shape index: {0}]
  %s5 = inlined_call_operand.hbm [shape: f32[2,4,8,8], index: 5, kind: output, shape index: {1}]
  %6 = xla_tuple %s4, %s5
  %s7 = sld [smem:[#allocation0]]
  $region57: #{tpu_custom_call.1} parent=0
    _
  %s9 = ssub.s32 1, %s7
  %s10 = scalar_select 0, %s9, %s7
  $region1: #{tpu_custom_call.1} parent=0
    #allocation2 [shape = 'u8[8192]{0}', space=vmem, size = 0x2000, scoped, tag = 'output window, operand 0']
    #allocation3 [shape = 's32[2]{0}', space=sflag, size = 0x8, scoped, tag = 'scoped memory for tpu_custom_call.1']
    #allocation4 [shape = 'u8[32768]{0}', space=vmem, size = 0x8000, scoped, tag = 'output window, operand 1']
    #allocation5 [shape = 's32[2]{0}', space=sflag, size = 0x8, scoped, tag = 'scoped memory for tpu_custom_call.1']
    %11 = vsyncpa [#allocation3], 0
    %s12 = scalar_lea.sflag [#allocation3], 1
    %13 = vsyncpa %s12, 0
    %14 = vsyncpa [#allocation5], 0
    %s15 = scalar_lea.sflag [#allocation5], 1
    %16 = vsyncpa %s15, 0
    loop: start=0, step=1, limit=4
    $region2: #{tpu_custom_call.1} parent=1 // loop_pre_header
      _
    $region3: #{tpu_custom_call.1} parent=1 // loop_header
      %s18 = sphi 0, %s22
      %p19 = scmp.ge.s32.totalorder %s18, 4
      %s28 = sphi 0, %s30
      %s31 = sphi 0, %s28
      %s32 = sphi 0, %s31
      %s48 = sphi 0, %s32
      %s52 = sphi 0, %s52
      %s54 = sphi 0, %s52
      %s55 = sphi 0, %s54
      %s69 = sphi 0, %s55
      %s73 = sphi 0, %s73
      %s75 = sphi 0, %s73
      %s76 = sphi 0, %s75
      %s90 = sphi 0, %s76
      %s94 = sphi 0, %s94
      %s96 = sphi 0, %s94
      %s97 = sphi 0, %s96
      %s111 = sphi 0, %s97
      %s117 = sphi 0, %s119
      %s120 = sphi 0, %s117
      %s121 = sphi 0, %s120
      %s137 = sphi 0, %s121
      %s143 = sphi 0, %s145
      %s146 = sphi 0, %s143
      %s147 = sphi 0, %s146
      %s163 = sphi 0, %s147
    $region4: #{tpu_custom_call.1} parent=1 // loop_header_branch
      %21 = sbr.rel (%p19) target = $region8
    $region5: #{tpu_custom_call.1} parent=1 // loop_body
      %s23 = ssub.s32 %s18, 1
      %s24 = ssub.s32 %s18, 2
      %s25 = sadd.s32 %s18, 1
      %s26 = ssub.s32 %s18, %s25
      %p27 = scmp.eq.s32.totalorder %s26, 0
      %s29 = sadd.s32 %s28, 1
      %s30 = scalar_select %p27, %s28, %s29
      %p33 = pneg %p27
      %p34 = scmp.eq.s32.totalorder %s18, 1
      %p35 = por %p33, %p34
      %p36 = scmp.ne.s32.totalorder %s28, %s31
      %p37 = scmp.eq.s32.totalorder %s18, 0
      %p38 = por %p36, %p37
      %p39 = scmp.ne.s32.totalorder %s28, %s31
      %p40 = scmp.eq.s32.totalorder %s23, 1
      %p41 = por %p39, %p40
      %p42 = scmp.ne.s32.totalorder %s31, %s32
      %p43 = scmp.eq.s32.totalorder %s23, 0
      %p44 = por %p42, %p43
      %p45 = scmp.ne.s32.totalorder %s31, %s32
      %p46 = scmp.eq.s32.totalorder %s24, 1
      %p47 = por %p45, %p46
      %p49 = scmp.ne.s32.totalorder %s32, %s48
      %p50 = scmp.eq.s32.totalorder %s24, 0
      %p51 = por %p49, %p50
      %s53 = sadd.s32 %s52, 1
      %p56 = scmp.eq.s32.totalorder %s18, 1
      %p57 = scmp.ne.s32.totalorder %s52, %s54
      %p58 = scmp.eq.s32.totalorder %s18, 0
      %p59 = por %p57, %p58
      %p60 = scmp.ne.s32.totalorder %s52, %s54
      %p61 = scmp.eq.s32.totalorder %s23, 1
      %p62 = por %p60, %p61
      %p63 = scmp.ne.s32.totalorder %s54, %s55
      %p64 = scmp.eq.s32.totalorder %s23, 0
      %p65 = por %p63, %p64
      %p66 = scmp.ne.s32.totalorder %s54, %s55
      %p67 = scmp.eq.s32.totalorder %s24, 1
      %p68 = por %p66, %p67
      %p70 = scmp.ne.s32.totalorder %s55, %s69
      %p71 = scmp.eq.s32.totalorder %s24, 0
      %p72 = por %p70, %p71
      %s74 = sadd.s32 %s73, 1
      %p77 = scmp.eq.s32.totalorder %s18, 1
      %p78 = scmp.ne.s32.totalorder %s73, %s75
      %p79 = scmp.eq.s32.totalorder %s18, 0
      %p80 = por %p78, %p79
      %p81 = scmp.ne.s32.totalorder %s73, %s75
      %p82 = scmp.eq.s32.totalorder %s23, 1
      %p83 = por %p81, %p82
      %p84 = scmp.ne.s32.totalorder %s75, %s76
      %p85 = scmp.eq.s32.totalorder %s23, 0
      %p86 = por %p84, %p85
      %p87 = scmp.ne.s32.totalorder %s75, %s76
      %p88 = scmp.eq.s32.totalorder %s24, 1
      %p89 = por %p87, %p88
      %p91 = scmp.ne.s32.totalorder %s76, %s90
      %p92 = scmp.eq.s32.totalorder %s24, 0
      %p93 = por %p91, %p92
      %s95 = sadd.s32 %s94, 1
      %p98 = scmp.eq.s32.totalorder %s18, 1
      %p99 = scmp.ne.s32.totalorder %s94, %s96
      %p100 = scmp.eq.s32.totalorder %s18, 0
      %p101 = por %p99, %p100
      %p102 = scmp.ne.s32.totalorder %s94, %s96
      %p103 = scmp.eq.s32.totalorder %s23, 1
      %p104 = por %p102, %p103
      %p105 = scmp.ne.s32.totalorder %s96, %s97
      %p106 = scmp.eq.s32.totalorder %s23, 0
      %p107 = por %p105, %p106
      %p108 = scmp.ne.s32.totalorder %s96, %s97
      %p109 = scmp.eq.s32.totalorder %s24, 1
      %p110 = por %p108, %p109
      %p112 = scmp.ne.s32.totalorder %s97, %s111
      %p113 = scmp.eq.s32.totalorder %s24, 0
      %p114 = por %p112, %p113
      %s115 = ssub.s32 %s18, %s25
      %p116 = scmp.eq.s32.totalorder %s115, 0
      %s118 = sadd.s32 %s117, 1
      %s119 = scalar_select %p116, %s117, %s118
      %p122 = pneg %p116
      %p123 = scmp.eq.s32.totalorder %s18, 1
      %p124 = por %p122, %p123
      %p125 = scmp.ne.s32.totalorder %s117, %s120
      %p126 = scmp.eq.s32.totalorder %s18, 0
      %p127 = por %p125, %p126
      %p128 = scmp.ne.s32.totalorder %s117, %s120
      %p129 = scmp.eq.s32.totalorder %s23, 1
      %p130 = por %p128, %p129
      %p131 = scmp.ne.s32.totalorder %s120, %s121
      %p132 = scmp.eq.s32.totalorder %s23, 0
      %p133 = por %p131, %p132
      %p134 = scmp.ne.s32.totalorder %s120, %s121
      %p135 = scmp.eq.s32.totalorder %s24, 1
      %p136 = por %p134, %p135
      %p138 = scmp.ne.s32.totalorder %s121, %s137
      %p139 = scmp.eq.s32.totalorder %s24, 0
      %p140 = por %p138, %p139
      %s141 = ssub.s32 %s18, %s25
      %p142 = scmp.eq.s32.totalorder %s141, 0
      %s144 = sadd.s32 %s143, 1
      %s145 = scalar_select %p142, %s143, %s144
      %p148 = pneg %p142
      %p149 = scmp.eq.s32.totalorder %s18, 1
      %p150 = por %p148, %p149
      %p151 = scmp.ne.s32.totalorder %s143, %s146
      %p152 = scmp.eq.s32.totalorder %s18, 0
      %p153 = por %p151, %p152
      %p154 = scmp.ne.s32.totalorder %s143, %s146
      %p155 = scmp.eq.s32.totalorder %s23, 1
      %p156 = por %p154, %p155
      %p157 = scmp.ne.s32.totalorder %s146, %s147
      %p158 = scmp.eq.s32.totalorder %s23, 0
      %p159 = por %p157, %p158
      %p160 = scmp.ne.s32.totalorder %s146, %s147
      %p161 = scmp.eq.s32.totalorder %s24, 1
      %p162 = por %p160, %p161
      %p164 = scmp.ne.s32.totalorder %s147, %s163
      %p165 = scmp.eq.s32.totalorder %s24, 0
      %p166 = por %p164, %p165
      %p167 = scmp.le.s32.totalorder 1, %s18
      %p168 = scmp.lt.s32.totalorder %s18, 3
      %p169 = pnand %p167, %p168
      %p170 = pneg %p169
      // Predicated region
      $region9: #{tpu_custom_call.1} parent=5 // pred_check
        _
      $region10: #{tpu_custom_call.1} parent=5 // pred_check_branch
        %172 = sbr.rel (%p169) target = $region12
      $region11: #{tpu_custom_call.1} parent=5 // pred_region
        %s173 = ssub.s32 %s18, 1
        // Predicated region
        $region13: #{tpu_custom_call.1} parent=11 // pred_check
          %p174 = pneg %p65
        $region14: #{tpu_custom_call.1} parent=11 // pred_check_branch
          %176 = sbr.rel (%p174) target = $region16
        $region15: #{tpu_custom_call.1} parent=11 // pred_region
          _
        $region16: #{tpu_custom_call.1} parent=11 // pred_fallthru
          _
        // Predicated region
        $region17: #{tpu_custom_call.1} parent=11 // pred_check
          %p177 = pneg %p86
        $region18: #{tpu_custom_call.1} parent=11 // pred_check_branch
          %179 = sbr.rel (%p177) target = $region20
        $region19: #{tpu_custom_call.1} parent=11 // pred_region
          _
        $region20: #{tpu_custom_call.1} parent=11 // pred_fallthru
          _
        // Predicated region
        $region21: #{tpu_custom_call.1} parent=11 // pred_check
          %p180 = pneg %p107
        $region22: #{tpu_custom_call.1} parent=11 // pred_check_branch
          %182 = sbr.rel (%p180) target = $region24
        $region23: #{tpu_custom_call.1} parent=11 // pred_region
          _
        $region24: #{tpu_custom_call.1} parent=11 // pred_fallthru
          _
      $region12: #{tpu_custom_call.1} parent=5 // pred_fallthru
        _
      %p183 = scmp.lt.s32.totalorder %s18, 2
      // Predicated region
      $region25: #{tpu_custom_call.1} parent=5 // pred_check
        %p184 = pneg %p183
      $region26: #{tpu_custom_call.1} parent=5 // pred_check_branch
        %186 = sbr.rel (%p184) target = $region28
      $region27: #{tpu_custom_call.1} parent=5 // pred_region
        // Predicated region
        $region29: #{tpu_custom_call.1} parent=27 // pred_check
          %p187 = pneg %p38
        $region30: #{tpu_custom_call.1} parent=27 // pred_check_branch
          %189 = sbr.rel (%p187) target = $region32
        $region31: #{tpu_custom_call.1} parent=27 // pred_region
          %p190 = scmp.lt.s32.totalorder %s18, 1
          %s191 = scalar_select %p190, %s18, 1
          %s192 = smul.addr %s191, 8
          %s193 = scalar_lea.vmem %s0, %s192
        $region32: #{tpu_custom_call.1} parent=27 // pred_fallthru
          _
      $region28: #{tpu_custom_call.1} parent=5 // pred_fallthru
        _
      %p194 = scmp.le.s32.totalorder 1, %s18
      %p195 = scmp.lt.s32.totalorder %s18, 3
      %p196 = pnand %p194, %p195
      %p197 = pneg %p196
      // Predicated region
      $region33: #{tpu_custom_call.1} parent=5 // pred_check
        _
      $region34: #{tpu_custom_call.1} parent=5 // pred_check_branch
        %199 = sbr.rel (%p196) target = $region36
      $region35: #{tpu_custom_call.1} parent=5 // pred_region
        %s200 = ssub.s32 %s18, 1
        %p201 = scmp.lt.s32.totalorder %s23, 1
        %s202 = scalar_select %p201, %s23, 1
        %s203 = smul.addr %s202, 8
        %s204 = scalar_lea.vmem %s0, %s203
        %p205 = pneg %p44
        %p206 = pneg %p41
        %p207 = pneg %p65
        %p208 = pneg %p62
        %p209 = pneg %p86
        %p210 = pneg %p83
        %p211 = pneg %p107
        %p212 = pneg %p104
        %p213 = pneg %p133
        %p214 = pneg %p130
        %s215 = sand.u32 %s120, 1
        %s216 = scalar_lea.sflag [#allocation3], %s215
        %s217 = sand.u32 %s120, 1
        %s218 = smul.addr %s217, 8
        %s219 = scalar_lea.vmem [#allocation2], %s218
        %p220 = pneg %p159
        %p221 = pneg %p156
        %s222 = sand.u32 %s146, 1
        %s223 = scalar_lea.sflag [#allocation5], %s222
        %s224 = sand.u32 %s146, 1
        %s225 = smul.addr %s224, 32
        %s226 = scalar_lea.vmem [#allocation4], %s225
        %p227 = scmp.lt.s32.totalorder %s23, 1
        %s228 = scalar_select %p227, %s23, 1
        %s229 = smul.addr %s228, 8
        %s230 = scalar_lea.vmem %s0, %s229
        %v231 = vld [vmem:[%s230] sm:$0xff]
        %v232 = vld [vmem:[%s1] sm:$0xff]
        %v233 = vld [vmem:[%s1 + $0x8] sm:$0xff]
        %v234 = vld [vmem:[%s1 + $0x10] sm:$0xff]
        %v235 = vld [vmem:[%s1 + $0x18] sm:$0xff]
        %v236 = vld [vmem:[%s1 + $0x20] sm:$0xff]
        %v237 = vld [vmem:[%s1 + $0x28] sm:$0xff]
        %v238 = vld [vmem:[%s1 + $0x30] sm:$0xff]
        %v239 = vld [vmem:[%s1 + $0x38] sm:$0xff]
        %vm240 = vcmask 261120
        %v242 = vsel %vm240, %v231, 0
        %244 = vmatpush.msra.mxu0 0.0
        %245 = vmatpush.msra.mxu0 0.0
        %246 = vmatpush.msra.mxu0 0.0
        %247 = vmatpush.msra.mxu0 0.0
        %248 = vmatpush.msra.mxu0 0.0
        %249 = vmatpush.msra.mxu0 0.0
        %250 = vmatpush.msra.mxu0 0.0
        %251 = vmatpush.msra.mxu0 0.0
        %252 = vmatpush.msra.mxu0 0.0
        %253 = vmatpush.msra.mxu0 0.0
        %254 = vmatpush.msra.mxu0 0.0
        %255 = vmatpush.msra.mxu0 0.0
        %256 = vmatpush.msra.mxu0 %v238
        %257 = vmatpush.msra.mxu0 %v236
        %258 = vmatpush.msra.mxu0 %v234
        %259 = vmatpush.msra.mxu0 %v232
        %260 = vmatmul.f32.gmra.mxu0 %v242
        %v261 = vpop.f32.mrf.mxu0
        %v262 = vadd.f32 0.0, %v261
        %263 = vdwg.mxu0
        %264 = vmatpush.msra.mxu0 0.0
        %265 = vmatpush.msra.mxu0 0.0
        %266 = vmatpush.msra.mxu0 0.0
        %267 = vmatpush.msra.mxu0 0.0
        %268 = vmatpush.msra.mxu0 0.0
        %269 = vmatpush.msra.mxu0 0.0
        %270 = vmatpush.msra.mxu0 0.0
        %271 = vmatpush.msra.mxu0 0.0
        %272 = vmatpush.msra.mxu0 0.0
        %273 = vmatpush.msra.mxu0 0.0
        %274 = vmatpush.msra.mxu0 0.0
        %275 = vmatpush.msra.mxu0 0.0
        %276 = vmatpush.msra.mxu0 %v239
        %277 = vmatpush.msra.mxu0 %v237
        %278 = vmatpush.msra.mxu0 %v235
        %279 = vmatpush.msra.mxu0 %v233
        %280 = vmatmul.f32.gmra.mxu0 %v242
        %v281 = vpop.f32.mrf.mxu0
        %v282 = vadd.f32 0.0, %v281
        %283 = vdwg.mxu0
        %285 = vrot.lane.b32.xlu0 %v262, 64
        %v286 = vpop.permute.xlu0 %285
        %vm287 = vcmask 130048
        %v288 = vsel %vm287, %v262, 0
        %v290 = vsel %vm287, %v286, 0
        %292 = vmatpush.xpose.msra.mxu0 0.0
        %293 = vmatpush.xpose.msra.mxu0 0.0
        %294 = vmatpush.xpose.msra.mxu0 0.0
        %295 = vmatpush.xpose.msra.mxu0 0.0
        %296 = vmatpush.xpose.msra.mxu0 0.0
        %297 = vmatpush.xpose.msra.mxu0 0.0
        %298 = vmatpush.xpose.msra.mxu0 0.0
        %299 = vmatpush.xpose.msra.mxu0 0.0
        %300 = vmatpush.xpose.msra.mxu0 0.0
        %301 = vmatpush.xpose.msra.mxu0 0.0
        %302 = vmatpush.xpose.msra.mxu0 0.0
        %303 = vmatpush.xpose.msra.mxu0 0.0
        %304 = vmatpush.xpose.msra.mxu0 0.0
        %305 = vmatpush.xpose.msra.mxu0 0.0
        %306 = vmatpush.xpose.msra.mxu0 0.0
        %307 = vmatpush.xpose.msra.mxu0 %v290
        %308 = vmatmul.f32.gmra.mxu0 %v288
        %v309 = vpop.f32.mrf.mxu0
        %v310 = vadd.f32 0.0, %v309
        %311 = vdwg.mxu0
        %vm312 = vcmask 64512
        %v313 = vsel %vm312, %v310, -inf
        %314 = vmax.xlane.f32.xlu0 %v313
        %v315 = vpop.xlane.xlu0 %314
        %v316 = vsub.f32 %v310, %v315
        %v317 = vmul.f32 %v316, 1.442695
        %v318 = vpow.pop %v317
        %v319 = vsel %vm312, %v318, 0.0
        %320 = vadd.xlane.f32.xlu0 %v319
        %v321 = vpop.xlane.xlu0 %320
        %v322 = vrcp.pop %v321
        %v323 = vmul.f32 %v321, %v322
        %v324 = vsub.f32 1.0, %v323
        %v325 = vmul.f32 %v322, %v324
        %v326 = vadd.f32 %v322, %v325
        %vm327 = vweird.f32 %v321
        %vm328 = vweird.f32 %v322
        %vm329 = vmor %vm327, %vm328
        %v330 = vsel %vm329, %v322, %v326
        %v331 = vand.u32 2147483647, %v321
        %vm332 = vcmp.eq.f32.partialorder %v331, 8.507059e+37
        %v333 = vand.u32 %v321, 2147483648
        %v334 = vor.u32 1.1754944e-38, %v333
        %v335 = vsel %vm332, %v334, %v330
        %v336 = vmul.f32 %v318, %v335
        %337 = vst.msk [vmem:[%s226] sm:$0xff] %vm312, %v336
        %v339 = vsel %vm312, %v336, 0
        %341 = vmatpush.msra.mxu0 0.0
        %342 = vmatpush.msra.mxu0 0.0
        %343 = vmatpush.msra.mxu0 0.0
        %344 = vmatpush.msra.mxu0 0.0
        %345 = vmatpush.msra.mxu0 0.0
        %346 = vmatpush.msra.mxu0 0.0
        %347 = vmatpush.msra.mxu0 0.0
        %348 = vmatpush.msra.mxu0 0.0
        %349 = vmatpush.msra.mxu0 0.0
        %350 = vmatpush.msra.mxu0 0.0
        %351 = vmatpush.msra.mxu0 0.0
        %352 = vmatpush.msra.mxu0 0.0
        %353 = vmatpush.msra.mxu0 0.0
        %354 = vmatpush.msra.mxu0 0.0
        %355 = vmatpush.msra.mxu0 0.0
        %356 = vmatpush.msra.mxu0 %v282
        %357 = vmatmul.f32.gmra.mxu0 %v339
        %v358 = vpop.f32.mrf.mxu0
        %v359 = vadd.f32 0.0, %v358
        %360 = vdwg.mxu0
        %361 = vrot.lane.b32.xlu0 %v262, 112
        %v362 = vpop.permute.xlu0 %361
        %363 = vrot.lane.b32.xlu0 %v262, 48
        %v364 = vpop.permute.xlu0 %363
        %v365 = vsel %vm287, %v362, 0
        %v367 = vsel %vm287, %v364, 0
        %369 = vmatpush.xpose.msra.mxu0 0.0
        %370 = vmatpush.xpose.msra.mxu0 0.0
        %371 = vmatpush.xpose.msra.mxu0 0.0
        %372 = vmatpush.xpose.msra.mxu0 0.0
        %373 = vmatpush.xpose.msra.mxu0 0.0
        %374 = vmatpush.xpose.msra.mxu0 0.0
        %375 = vmatpush.xpose.msra.mxu0 0.0
        %376 = vmatpush.xpose.msra.mxu0 0.0
        %377 = vmatpush.xpose.msra.mxu0 0.0
        %378 = vmatpush.xpose.msra.mxu0 0.0
        %379 = vmatpush.xpose.msra.mxu0 0.0
        %380 = vmatpush.xpose.msra.mxu0 0.0
        %381 = vmatpush.xpose.msra.mxu0 0.0
        %382 = vmatpush.xpose.msra.mxu0 0.0
        %383 = vmatpush.xpose.msra.mxu0 0.0
        %384 = vmatpush.xpose.msra.mxu0 %v367
        %385 = vmatmul.f32.gmra.mxu0 %v365
        %v386 = vpop.f32.mrf.mxu0
        %v387 = vadd.f32 0.0, %v386
        %388 = vdwg.mxu0
        %v389 = vsel %vm312, %v387, -inf
        %390 = vmax.xlane.f32.xlu0 %v389
        %v391 = vpop.xlane.xlu0 %390
        %v392 = vsub.f32 %v387, %v391
        %v393 = vmul.f32 %v392, 1.442695
        %v394 = vpow.pop %v393
        %v395 = vsel %vm312, %v394, 0.0
        %396 = vadd.xlane.f32.xlu0 %v395
        %v397 = vpop.xlane.xlu0 %396
        %v398 = vrcp.pop %v397
        %v399 = vmul.f32 %v397, %v398
        %v400 = vsub.f32 1.0, %v399
        %v401 = vmul.f32 %v398, %v400
        %v402 = vadd.f32 %v398, %v401
        %vm403 = vweird.f32 %v397
        %vm404 = vweird.f32 %v398
        %vm405 = vmor %vm403, %vm404
        %v406 = vsel %vm405, %v398, %v402
        %v407 = vand.u32 2147483647, %v397
        %vm408 = vcmp.eq.f32.partialorder %v407, 8.507059e+37
        %v409 = vand.u32 %v397, 2147483648
        %v410 = vor.u32 1.1754944e-38, %v409
        %v411 = vsel %vm408, %v410, %v406
        %v412 = vmul.f32 %v394, %v411
        %s413 = scalar_lea.vmem %s226, 8 [#allocation4]
        %414 = vst.msk [vmem:[%s413] sm:$0xff] %vm312, %v412
        %416 = vrot.lane.b32.xlu0 %v282, 112
        %v417 = vpop.permute.xlu0 %416
        %v420 = vsel %vm312, %v412, 0
        %422 = vmatpush.msra.mxu0 0.0
        %423 = vmatpush.msra.mxu0 0.0
        %424 = vmatpush.msra.mxu0 0.0
        %425 = vmatpush.msra.mxu0 0.0
        %426 = vmatpush.msra.mxu0 0.0
        %427 = vmatpush.msra.mxu0 0.0
        %428 = vmatpush.msra.mxu0 0.0
        %429 = vmatpush.msra.mxu0 0.0
        %430 = vmatpush.msra.mxu0 0.0
        %431 = vmatpush.msra.mxu0 0.0
        %432 = vmatpush.msra.mxu0 0.0
        %433 = vmatpush.msra.mxu0 0.0
        %434 = vmatpush.msra.mxu0 0.0
        %435 = vmatpush.msra.mxu0 0.0
        %436 = vmatpush.msra.mxu0 0.0
        %437 = vmatpush.msra.mxu0 %v417
        %438 = vmatmul.f32.gmra.mxu0 %v420
        %v439 = vpop.f32.mrf.mxu0
        %v440 = vadd.f32 0.0, %v439
        %441 = vdwg.mxu0
        %442 = vrot.lane.b32.xlu0 %v262, 96
        %v443 = vpop.permute.xlu0 %442
        %444 = vrot.lane.b32.xlu0 %v262, 32
        %v445 = vpop.permute.xlu0 %444
        %v446 = vsel %vm287, %v443, 0
        %v448 = vsel %vm287, %v445, 0
        %450 = vmatpush.xpose.msra.mxu0 0.0
        %451 = vmatpush.xpose.msra.mxu0 0.0
        %452 = vmatpush.xpose.msra.mxu0 0.0
        %453 = vmatpush.xpose.msra.mxu0 0.0
        %454 = vmatpush.xpose.msra.mxu0 0.0
        %455 = vmatpush.xpose.msra.mxu0 0.0
        %456 = vmatpush.xpose.msra.mxu0 0.0
        %457 = vmatpush.xpose.msra.mxu0 0.0
        %458 = vmatpush.xpose.msra.mxu0 0.0
        %459 = vmatpush.xpose.msra.mxu0 0.0
        %460 = vmatpush.xpose.msra.mxu0 0.0
        %461 = vmatpush.xpose.msra.mxu0 0.0
        %462 = vmatpush.xpose.msra.mxu0 0.0
        %463 = vmatpush.xpose.msra.mxu0 0.0
        %464 = vmatpush.xpose.msra.mxu0 0.0
        %465 = vmatpush.xpose.msra.mxu0 %v448
        %466 = vmatmul.f32.gmra.mxu0 %v446
        %v467 = vpop.f32.mrf.mxu0
        %v468 = vadd.f32 0.0, %v467
        %469 = vdwg.mxu0
        %v470 = vsel %vm312, %v468, -inf
        %471 = vmax.xlane.f32.xlu0 %v470
        %v472 = vpop.xlane.xlu0 %471
        %v473 = vsub.f32 %v468, %v472
        %v474 = vmul.f32 %v473, 1.442695
        %v475 = vpow.pop %v474
        %v476 = vsel %vm312, %v475, 0.0
        %477 = vadd.xlane.f32.xlu0 %v476
        %v478 = vpop.xlane.xlu0 %477
        %v479 = vrcp.pop %v478
        %v480 = vmul.f32 %v478, %v479
        %v481 = vsub.f32 1.0, %v480
        %v482 = vmul.f32 %v479, %v481
        %v483 = vadd.f32 %v479, %v482
        %vm484 = vweird.f32 %v478
        %vm485 = vweird.f32 %v479
        %vm486 = vmor %vm484, %vm485
        %v487 = vsel %vm486, %v479, %v483
        %v488 = vand.u32 2147483647, %v478
        %vm489 = vcmp.eq.f32.partialorder %v488, 8.507059e+37
        %v490 = vand.u32 %v478, 2147483648
        %v491 = vor.u32 1.1754944e-38, %v490
        %v492 = vsel %vm489, %v491, %v487
        %v493 = vmul.f32 %v475, %v492
        %s494 = scalar_lea.vmem %s226, 16 [#allocation4]
        %495 = vst.msk [vmem:[%s494] sm:$0xff] %vm312, %v493
        %496 = vrot.lane.b32.xlu0 %v282, 96
        %v497 = vpop.permute.xlu0 %496
        %v500 = vsel %vm312, %v493, 0
        %502 = vmatpush.msra.mxu0 0.0
        %503 = vmatpush.msra.mxu0 0.0
        %504 = vmatpush.msra.mxu0 0.0
        %505 = vmatpush.msra.mxu0 0.0
        %506 = vmatpush.msra.mxu0 0.0
        %507 = vmatpush.msra.mxu0 0.0
        %508 = vmatpush.msra.mxu0 0.0
        %509 = vmatpush.msra.mxu0 0.0
        %510 = vmatpush.msra.mxu0 0.0
        %511 = vmatpush.msra.mxu0 0.0
        %512 = vmatpush.msra.mxu0 0.0
        %513 = vmatpush.msra.mxu0 0.0
        %514 = vmatpush.msra.mxu0 0.0
        %515 = vmatpush.msra.mxu0 0.0
        %516 = vmatpush.msra.mxu0 0.0
        %517 = vmatpush.msra.mxu0 %v497
        %518 = vmatmul.f32.gmra.mxu0 %v500
        %v519 = vpop.f32.mrf.mxu0
        %v520 = vadd.f32 0.0, %v519
        %521 = vdwg.mxu0
        %522 = vrot.lane.b32.xlu0 %v262, 80
        %v523 = vpop.permute.xlu0 %522
        %524 = vrot.lane.b32.xlu0 %v262, 16
        %v525 = vpop.permute.xlu0 %524
        %v526 = vsel %vm287, %v523, 0
        %v528 = vsel %vm287, %v525, 0
        %530 = vmatpush.xpose.msra.mxu0 0.0
        %531 = vmatpush.xpose.msra.mxu0 0.0
        %532 = vmatpush.xpose.msra.mxu0 0.0
        %533 = vmatpush.xpose.msra.mxu0 0.0
        %534 = vmatpush.xpose.msra.mxu0 0.0
        %535 = vmatpush.xpose.msra.mxu0 0.0
        %536 = vmatpush.xpose.msra.mxu0 0.0
        %537 = vmatpush.xpose.msra.mxu0 0.0
        %538 = vmatpush.xpose.msra.mxu0 0.0
        %539 = vmatpush.xpose.msra.mxu0 0.0
        %540 = vmatpush.xpose.msra.mxu0 0.0
        %541 = vmatpush.xpose.msra.mxu0 0.0
        %542 = vmatpush.xpose.msra.mxu0 0.0
        %543 = vmatpush.xpose.msra.mxu0 0.0
        %544 = vmatpush.xpose.msra.mxu0 0.0
        %545 = vmatpush.xpose.msra.mxu0 %v528
        %546 = vmatmul.f32.gmra.mxu0 %v526
        %v547 = vpop.f32.mrf.mxu0
        %v548 = vadd.f32 0.0, %v547
        %549 = vdwg.mxu0
        %v550 = vsel %vm312, %v548, -inf
        %551 = vmax.xlane.f32.xlu0 %v550
        %v552 = vpop.xlane.xlu0 %551
        %v553 = vsub.f32 %v548, %v552
        %v554 = vmul.f32 %v553, 1.442695
        %v555 = vpow.pop %v554
        %v556 = vsel %vm312, %v555, 0.0
        %557 = vadd.xlane.f32.xlu0 %v556
        %v558 = vpop.xlane.xlu0 %557
        %v559 = vrcp.pop %v558
        %v560 = vmul.f32 %v558, %v559
        %v561 = vsub.f32 1.0, %v560
        %v562 = vmul.f32 %v559, %v561
        %v563 = vadd.f32 %v559, %v562
        %vm564 = vweird.f32 %v558
        %vm565 = vweird.f32 %v559
        %vm566 = vmor %vm564, %vm565
        %v567 = vsel %vm566, %v559, %v563
        %v568 = vand.u32 2147483647, %v558
        %vm569 = vcmp.eq.f32.partialorder %v568, 8.507059e+37
        %v570 = vand.u32 %v558, 2147483648
        %v571 = vor.u32 1.1754944e-38, %v570
        %v572 = vsel %vm569, %v571, %v567
        %v573 = vmul.f32 %v555, %v572
        %s574 = scalar_lea.vmem %s226, 24 [#allocation4]
        %575 = vst.msk [vmem:[%s574] sm:$0xff] %vm312, %v573
        %576 = vrot.lane.b32.xlu0 %v282, 80
        %v577 = vpop.permute.xlu0 %576
        %v580 = vsel %vm312, %v573, 0
        %582 = vmatpush.msra.mxu0 0.0
        %583 = vmatpush.msra.mxu0 0.0
        %584 = vmatpush.msra.mxu0 0.0
        %585 = vmatpush.msra.mxu0 0.0
        %586 = vmatpush.msra.mxu0 0.0
        %587 = vmatpush.msra.mxu0 0.0
        %588 = vmatpush.msra.mxu0 0.0
        %589 = vmatpush.msra.mxu0 0.0
        %590 = vmatpush.msra.mxu0 0.0
        %591 = vmatpush.msra.mxu0 0.0
        %592 = vmatpush.msra.mxu0 0.0
        %593 = vmatpush.msra.mxu0 0.0
        %594 = vmatpush.msra.mxu0 0.0
        %595 = vmatpush.msra.mxu0 0.0
        %596 = vmatpush.msra.mxu0 0.0
        %597 = vmatpush.msra.mxu0 %v577
        %598 = vmatmul.f32.gmra.mxu0 %v580
        %v599 = vpop.f32.mrf.mxu0
        %v600 = vadd.f32 0.0, %v599
        %601 = vdwg.mxu0
        %603 = vrot.lane.b32.xlu0 %v440, 16
        %v604 = vpop.permute.xlu0 %603
        %607 = vrot.lane.b32.xlu0 %v520, 32
        %v608 = vpop.permute.xlu0 %607
        %611 = vrot.lane.b32.xlu0 %v600, 48
        %v612 = vpop.permute.xlu0 %611
        %v614 = vsel %vm287, %v359, %v604
        %v615 = vsel %vm240, %v614, %v608
        %vm616 = vcmask 392192
        %v617 = vsel %vm616, %v615, %v612
        %v618 = vld [vmem:[%s2] sm:$0xff]
        %v619 = vld [vmem:[%s2 + $0x8] sm:$0xff]
        %v620 = vld [vmem:[%s2 + $0x10] sm:$0xff]
        %v621 = vld [vmem:[%s2 + $0x18] sm:$0xff]
        %v622 = vld [vmem:[%s2 + $0x20] sm:$0xff]
        %v623 = vld [vmem:[%s2 + $0x28] sm:$0xff]
        %v624 = vld [vmem:[%s2 + $0x30] sm:$0xff]
        %v625 = vld [vmem:[%s2 + $0x38] sm:$0xff]
        %v626 = vld [vmem:[%s3] sm:$0x1]
        %v628 = vperm.slane %v626, 0
        %vm630 = vcmask 523264
        %v632 = vsel %vm630, %v617, 0
        %634 = vmatpush.msra.mxu0 0.0
        %635 = vmatpush.msra.mxu0 0.0
        %636 = vmatpush.msra.mxu0 0.0
        %637 = vmatpush.msra.mxu0 0.0
        %638 = vmatpush.msra.mxu0 0.0
        %639 = vmatpush.msra.mxu0 0.0
        %640 = vmatpush.msra.mxu0 0.0
        %641 = vmatpush.msra.mxu0 0.0
        %642 = vmatpush.msra.mxu0 %v625
        %643 = vmatpush.msra.mxu0 %v624
        %644 = vmatpush.msra.mxu0 %v623
        %645 = vmatpush.msra.mxu0 %v622
        %646 = vmatpush.msra.mxu0 %v621
        %647 = vmatpush.msra.mxu0 %v620
        %648 = vmatpush.msra.mxu0 %v619
        %649 = vmatpush.msra.mxu0 %v618
        %650 = vmatmul.f32.gmra.mxu0 %v632
        %v651 = vpop.f32.mrf.mxu0
        %v652 = vadd.f32 %v628, %v651
        %653 = vdwg.mxu0
        %654 = vst.msk [vmem:[%s219] sm:$0xff] %vm240, %v652
        %s655 = sand.u32 %s120, 1
        %s656 = scalar_lea.sflag [#allocation3], %s655
        %s657 = sand.u32 %s120, 1
        %s658 = smul.addr %s657, 8
        %s659 = scalar_lea.vmem [#allocation2], %s658
        %s660 = sand.u32 %s146, 1
        %s661 = scalar_lea.sflag [#allocation5], %s660
        %s662 = sand.u32 %s146, 1
        %s663 = smul.addr %s662, 32
        %s664 = scalar_lea.vmem [#allocation4], %s663
        // Predicated region
        $region37: #{tpu_custom_call.1} parent=35 // pred_check
          %p665 = pneg %p130
        $region38: #{tpu_custom_call.1} parent=35 // pred_check_branch
          %667 = sbr.rel (%p665) target = $region40
        $region39: #{tpu_custom_call.1} parent=35 // pred_region
          %669 = vsyncadd %s656, 0
          %s670 = smul.addr %s23, 8
          %s671 = scalar_lea.hbm %s4, %s670
          %s673 = sshll.u32 %s659, 4
          %s674 = int_to_ptr.vmem [resolvable:$true] %s673
          %s675 = sshll.u32 %s671, 4
          %s676 = int_to_ptr.hbm [resolvable:$true] %s675
          %678 = dma.vmem_to_hbm [thread:$0]  %s674, 128, %s676, %s656
        $region40: #{tpu_custom_call.1} parent=35 // pred_fallthru
          _
        // Predicated region
        $region41: #{tpu_custom_call.1} parent=35 // pred_check
          %p679 = pneg %p156
        $region42: #{tpu_custom_call.1} parent=35 // pred_check_branch
          %681 = sbr.rel (%p679) target = $region44
        $region43: #{tpu_custom_call.1} parent=35 // pred_region
          %683 = vsyncadd %s661, 0
          %s684 = smul.addr %s23, 4
          %s685 = smul.addr %s684, 8
          %s686 = scalar_lea.hbm %s5, %s685
          %s687 = sshll.u32 %s664, 4
          %s688 = int_to_ptr.vmem [resolvable:$true] %s687
          %s689 = sshll.u32 %s686, 4
          %s690 = int_to_ptr.hbm [resolvable:$true] %s689
          %695 = dma.vmem_to_hbm [thread:$0]  %s688, 512, %s690, %s661, 128, 128, 8
        $region44: #{tpu_custom_call.1} parent=35 // pred_fallthru
          _
      $region36: #{tpu_custom_call.1} parent=5 // pred_fallthru
        _
      %p696 = scmp.le.s32.totalorder 2, %s18
      // Predicated region
      $region45: #{tpu_custom_call.1} parent=5 // pred_check
        %p697 = pneg %p696
      $region46: #{tpu_custom_call.1} parent=5 // pred_check_branch
        %699 = sbr.rel (%p697) target = $region48
      $region47: #{tpu_custom_call.1} parent=5 // pred_region
        %s700 = ssub.s32 %s18, 2
        // Predicated region
        $region49: #{tpu_custom_call.1} parent=47 // pred_check
          %p701 = pneg %p136
        $region50: #{tpu_custom_call.1} parent=47 // pred_check_branch
          %703 = sbr.rel (%p701) target = $region52
        $region51: #{tpu_custom_call.1} parent=47 // pred_region
          %s704 = sand.u32 %s121, 1
          %s705 = scalar_lea.sflag [#allocation3], %s704
          %s706 = sand.u32 %s121, 1
          %s707 = smul.addr %s706, 8
          %s708 = scalar_lea.vmem [#allocation2], %s707
          %710 = dma.done %s705, 128
        $region52: #{tpu_custom_call.1} parent=47 // pred_fallthru
          _
        // Predicated region
        $region53: #{tpu_custom_call.1} parent=47 // pred_check
          %p711 = pneg %p162
        $region54: #{tpu_custom_call.1} parent=47 // pred_check_branch
          %713 = sbr.rel (%p711) target = $region56
        $region55: #{tpu_custom_call.1} parent=47 // pred_region
          %s714 = sand.u32 %s147, 1
          %s715 = scalar_lea.sflag [#allocation5], %s714
          %s716 = sand.u32 %s147, 1
          %s717 = smul.addr %s716, 32
          %s718 = scalar_lea.vmem [#allocation4], %s717
          %720 = dma.done %s715, 512
        $region56: #{tpu_custom_call.1} parent=47 // pred_fallthru
          _
      $region48: #{tpu_custom_call.1} parent=5 // pred_fallthru
        _
    $region6: #{tpu_custom_call.1} parent=1 // loop_footer
      %s22 = sadd.s32 1, %s18
    $region7: #{tpu_custom_call.1} parent=1 // loop_footer_branch
      %17 = sbr.rel target = $region3
    $region8: #{tpu_custom_call.1} parent=1 // loop_exit
      _
    %721 = vsyncpa [#allocation3], 1
    %s722 = scalar_lea.sflag [#allocation3], 1
    %723 = vsyncpa %s722, 1
    %724 = vsyncpa [#allocation5], 1
    %s725 = scalar_lea.sflag [#allocation5], 1
    %726 = vsyncpa %s725, 1

</llo_original>
